<compile_context>
chip_gen: v5e
topology: v5e:2x2
jax: 0.10.0
libtpu: 0.0.40
codegen_flags: <defaults>
</compile_context>

<pallas_src>
import functools

import jax
import jax.numpy as jnp
from jax.experimental import pallas as pl
from jax.experimental.pallas import tpu as pltpu

_LANE = 128


def _gce_kernel(x_ref, t_ref, m_ref, out_ref, acc_ref, *, q, inv_qn):
    """Processes one (C, TILE_N) tile of samples; accumulates a masked sum."""
    step = pl.program_id(1)

    @pl.when(step == 0)
    def _():
        acc_ref[...] = jnp.zeros_like(acc_ref)

    x = x_ref[...].astype(jnp.float32)        # (C, TILE_N)  classes x samples
    t = t_ref[...]                            # (1, TILE_N)  int32 class ids
    m = m_ref[...].astype(jnp.float32)        # (1, TILE_N)  sample mask

    # Only the target-class log-probability is needed: no full softmax.
    x_max = jnp.max(x, axis=0, keepdims=True)                    # (1, TILE_N)
    x_shift = x - x_max                                          # (C, TILE_N)
    sum_e = jnp.sum(jnp.exp(x_shift), axis=0, keepdims=True)     # (1, TILE_N)

    cls = jax.lax.broadcasted_iota(jnp.int32, x.shape, 0)        # class index
    x_t = jnp.sum(jnp.where(cls == t, x_shift, 0.0), axis=0, keepdims=True)

    # pred_y**q = exp(q * log softmax(x)[target]); finite even if the target
    # probability would underflow to 0.
    pred_y_q = jnp.exp(q * (x_t - jnp.log(sum_e)))               # (1, TILE_N)

    acc_ref[...] += jnp.sum((1.0 - pred_y_q) * m, axis=1, keepdims=True)

    @pl.when(step == pl.num_programs(1) - 1)
    def _():
        out_ref[...] = jnp.broadcast_to(acc_ref[...] * inv_qn, out_ref.shape)


def gce_loss_masked(ind, outputs, targets, mask, *, q=0.2, class_num=12,
                    max_tile=32768, num_parts=2):
    """JAX/Pallas equivalent of GCE_loss_masked.forward. `ind` is unused."""
    del ind
    n, c = outputs.shape
    assert c == class_num

    # Tile choice: samples per grid step, lane aligned, split across
    # `num_parts` (leading "parallel" axis -> megacore split on v7x; on
    # single-TC chips it just iterates).
    n_per_part = pl.cdiv(n, num_parts)
    steps = pl.cdiv(n_per_part, max_tile)
    tile = pl.cdiv(pl.cdiv(n_per_part, steps), _LANE) * _LANE
    n_pad = num_parts * steps * tile
    pad = n_pad - n

    # Pad along N (padded samples carry mask=0 -> contribute nothing) and put
    # samples on the lane axis. Logits keep their producer dtype in HBM.
    # TODO(synk): at production scale the producer should emit the (C, N)
    # layout directly so this transpose is not a separate HBM pass.
    outputs_t = jnp.pad(outputs, ((0, pad), (0, 0))).T            # (C, n_pad)
    targets_p = jnp.pad(targets.reshape(-1).astype(jnp.int32), (0, pad))
    targets_p = targets_p.reshape(1, n_pad)
    mask_p = jnp.pad(mask.reshape(-1).astype(jnp.float32), (0, pad))
    mask_p = mask_p.reshape(1, n_pad)

    kernel = functools.partial(
        _gce_kernel, q=float(q), inv_qn=1.0 / (float(q) * float(n)))

    out = pl.pallas_call(
        kernel,
        out_shape=jax.ShapeDtypeStruct((num_parts * 8, _LANE), jnp.float32),
        grid_spec=pltpu.PrefetchScalarGridSpec(
            num_scalar_prefetch=0,
            grid=(num_parts, steps),
            in_specs=[
                pl.BlockSpec((c, tile), lambda p, i: (0, p * steps + i)),
                pl.BlockSpec((1, tile), lambda p, i: (0, p * steps + i)),
                pl.BlockSpec((1, tile), lambda p, i: (0, p * steps + i)),
            ],
            out_specs=pl.BlockSpec((8, _LANE), lambda p, i: (p, 0)),
            scratch_shapes=[pltpu.VMEM((1, 1), jnp.float32)],
        ),
        compiler_params=pltpu.CompilerParams(
            dimension_semantics=("parallel", "arbitrary"),
            vmem_limit_bytes=32 * 1024 * 1024,
        ),
        cost_estimate=pl.CostEstimate(
            flops=6 * n_pad * c + 8 * n_pad,
            transcendentals=n_pad * c + 2 * n_pad,
            bytes_accessed=(n_pad * c * outputs.dtype.itemsize
                            + 8 * n_pad + num_parts * 8 * _LANE * 4),
        ),
    )(outputs_t, targets_p, mask_p)

    # Each part broadcasts its scaled partial sum over its own (8, 128) tile;
    # add the per-part partials (trivial wrapper reduction).
    return jnp.sum(out[::8, 0])


def _reference(outputs, targets, mask, q=0.2, class_num=12):
    onehot = jax.nn.one_hot(targets, class_num, dtype=jnp.float32)
    pred = jax.nn.softmax(outputs.astype(jnp.float32), axis=1)
    pred_y = jnp.sum(onehot * pred, axis=1)
    return jnp.mean((1.0 - pred_y ** q) / q * mask.astype(jnp.float32), axis=0)


if __name__ == "__main__":
    key = jax.random.PRNGKey(0)
    k1, k2, k3 = jax.random.split(key, 3)

    N, CLS = 16, 12                     # sample_num-like batch, class_num=12
    outputs = jax.random.normal(k1, (N, CLS), dtype=jnp.float32)
    targets = jax.random.randint(k2, (N,), 0, CLS, dtype=jnp.int32)
    mask = (jax.random.uniform(k3, (N,)) > 0.3).astype(jnp.float32)
    ind = jnp.arange(N, dtype=jnp.int32)  # unused by forward, kept for parity

    loss = gce_loss_masked(ind, outputs, targets, mask, q=0.2, class_num=CLS)
    loss = jax.block_until_ready(loss)

    ref = _reference(outputs, targets, mask, q=0.2, class_num=CLS)
    assert jnp.allclose(loss, ref, atol=1e-5, rtol=1e-5), (loss, ref)

    print("KERNEL_OK")
</pallas_src>

<mosaic_0001>
module attributes {stable_mosaic.version = 11 : i64} {
  func.func @_gce_kernel(%arg0: i32, %arg1: i32, %arg2: memref<12x128xf32, #tpu.memory_space<vmem>>, %arg3: memref<1x128xi32, #tpu.memory_space<vmem>>, %arg4: memref<1x128xf32, #tpu.memory_space<vmem>>, %arg5: memref<8x128xf32, #tpu.memory_space<vmem>>, %arg6: memref<1x1xf32, #tpu.memory_space<vmem>>) attributes {dimension_semantics = [#tpu.dimension_semantics<parallel>, #tpu.dimension_semantics<arbitrary>], iteration_bounds = array<i64: 2, 1>, scalar_prefetch = 0 : i64, scratch_operands = 1 : i64, tpu.core_type = #tpu.core_type<tc>, window_params = [{transform_indices = @transform_0, window_bounds = array<i64: 12, 128>}, {transform_indices = @transform_1, window_bounds = array<i64: 1, 128>}, {transform_indices = @transform_2, window_bounds = array<i64: 1, 128>}, {transform_indices = @transform_3, window_bounds = array<i64: 8, 128>}]} {
    %c0_i32 = arith.constant 0 : i32
    %0 = arith.cmpi eq, %arg1, %c0_i32 : i32
    %1 = arith.extui %0 : i1 to i32
    %c0_i32_0 = arith.constant 0 : i32
    %2 = arith.cmpi ne, %1, %c0_i32_0 : i32
    scf.if %2 {
      %cst_18 = arith.constant 0.000000e+00 : f32
      %36 = vector.broadcast %cst_18 : f32 to vector<1x1xf32>
      %c0_19 = arith.constant 0 : index
      %c0_20 = arith.constant 0 : index
      %37 = vector.load %arg6[%c0_19, %c0_20] : memref<1x1xf32, #tpu.memory_space<vmem>>, vector<1x1xf32>
      tpu.vector_store %arg6[%c0_19, %c0_20], %36 {strides = array<i32>} : memref<1x1xf32, #tpu.memory_space<vmem>>, vector<1x1xf32>,
    } else {
    }
    %c0 = arith.constant 0 : index
    %c0_1 = arith.constant 0 : index
    %3 = vector.load %arg2[%c0, %c0_1] : memref<12x128xf32, #tpu.memory_space<vmem>>, vector<12x128xf32>
    %c0_2 = arith.constant 0 : index
    %c0_3 = arith.constant 0 : index
    %4 = vector.load %arg3[%c0_2, %c0_3] : memref<1x128xi32, #tpu.memory_space<vmem>>, vector<1x128xi32>
    %c0_4 = arith.constant 0 : index
    %c0_5 = arith.constant 0 : index
    %5 = vector.load %arg4[%c0_4, %c0_5] : memref<1x128xf32, #tpu.memory_space<vmem>>, vector<1x128xf32>
    %cst = arith.constant dense<0xFF800000> : vector<128xf32>
    %6 = vector.multi_reduction <maximumf>, %3, %cst [0] : vector<12x128xf32> to vector<128xf32>
    %7 = vector.shape_cast %6 : vector<128xf32> to vector<1x128xf32>
    %8 = vector.broadcast %7 : vector<1x128xf32> to vector<12x128xf32>
    %9 = arith.subf %3, %8 : vector<12x128xf32>
    %10 = math.exp %9 : vector<12x128xf32>
    %cst_6 = arith.constant dense<0.000000e+00> : vector<128xf32>
    %11 = vector.multi_reduction <add>, %10, %cst_6 [0] : vector<12x128xf32> to vector<128xf32>
    %12 = vector.shape_cast %11 : vector<128xf32> to vector<1x128xf32>
    %13 = tpu.iota {dimensions = array<i32: 0>} : vector<12x128xi32>
    %14 = vector.broadcast %4 : vector<1x128xi32> to vector<12x128xi32>
    %15 = arith.cmpi eq, %13, %14 : vector<12x128xi32>
    %cst_7 = arith.constant 0.000000e+00 : f32
    %16 = vector.broadcast %cst_7 : f32 to vector<12x128xf32>
    %17 = arith.select %15, %9, %16 : vector<12x128xi1>, vector<12x128xf32>
    %cst_8 = arith.constant dense<0.000000e+00> : vector<128xf32>
    %18 = vector.multi_reduction <add>, %17, %cst_8 [0] : vector<12x128xf32> to vector<128xf32>
    %19 = vector.shape_cast %18 : vector<128xf32> to vector<1x128xf32>
    %20 = math.log %12 : vector<1x128xf32>
    %21 = arith.subf %19, %20 : vector<1x128xf32>
    %cst_9 = arith.constant 2.000000e-01 : f32
    %22 = vector.broadcast %cst_9 : f32 to vector<1x128xf32>
    %23 = arith.mulf %22, %21 : vector<1x128xf32>
    %24 = math.exp %23 : vector<1x128xf32>
    %c0_10 = arith.constant 0 : index
    %c0_11 = arith.constant 0 : index
    %25 = vector.load %arg6[%c0_10, %c0_11] : memref<1x1xf32, #tpu.memory_space<vmem>>, vector<1x1xf32>
    %cst_12 = arith.constant 1.000000e+00 : f32
    %26 = vector.broadcast %cst_12 : f32 to vector<1x128xf32>
    %27 = arith.subf %26, %24 : vector<1x128xf32>
    %28 = arith.mulf %27, %5 : vector<1x128xf32>
    %cst_13 = arith.constant dense<0.000000e+00> : vector<1xf32>
    %29 = vector.multi_reduction <add>, %28, %cst_13 [1] : vector<1x128xf32> to vector<1xf32>
    %30 = vector.shape_cast %29 : vector<1xf32> to vector<1x1xf32>
    %31 = arith.addf %25, %30 : vector<1x1xf32>
    %c0_14 = arith.constant 0 : index
    %c0_15 = arith.constant 0 : index
    %32 = vector.load %arg6[%c0_14, %c0_15] : memref<1x1xf32, #tpu.memory_space<vmem>>, vector<1x1xf32>
    tpu.vector_store %arg6[%c0_14, %c0_15], %31 {strides = array<i32>} : memref<1x1xf32, #tpu.memory_space<vmem>>, vector<1x1xf32>,
    %c0_i32_16 = arith.constant 0 : i32
    %33 = arith.cmpi eq, %arg1, %c0_i32_16 : i32
    %34 = arith.extui %33 : i1 to i32
    %c0_i32_17 = arith.constant 0 : i32
    %35 = arith.cmpi ne, %34, %c0_i32_17 : i32
    scf.if %35 {
      %c0_18 = arith.constant 0 : index
      %c0_19 = arith.constant 0 : index
      %36 = vector.load %arg6[%c0_18, %c0_19] : memref<1x1xf32, #tpu.memory_space<vmem>>, vector<1x1xf32>
      %cst_20 = arith.constant 3.125000e-01 : f32
      %37 = vector.broadcast %cst_20 : f32 to vector<1x1xf32>
      %38 = arith.mulf %36, %37 : vector<1x1xf32>
      %39 = vector.shape_cast %38 : vector<1x1xf32> to vector<1x1xf32>
      %40 = vector.broadcast %39 : vector<1x1xf32> to vector<8x128xf32>
      %c0_21 = arith.constant 0 : index
      %c0_22 = arith.constant 0 : index
      %41 = vector.load %arg5[%c0_21, %c0_22] : memref<8x128xf32, #tpu.memory_space<vmem>>, vector<8x128xf32>
      tpu.vector_store %arg5[%c0_21, %c0_22], %40 {strides = array<i32>} : memref<8x128xf32, #tpu.memory_space<vmem>>, vector<8x128xf32>,
    } else {
    }
    return
  }
  func.func @transform_0(%arg0: i32, %arg1: i32) -> (i32, i32) {
    %c1_i32 = arith.constant 1 : i32
    %0 = arith.muli %arg0, %c1_i32 : i32
    %1 = arith.addi %0, %arg1 : i32
    %c0_i32 = arith.constant 0 : i32
    %c0_i32_0 = arith.constant 0 : i32
    return %c0_i32, %1 : i32, i32
  }
  func.func @transform_1(%arg0: i32, %arg1: i32) -> (i32, i32) {
    %c1_i32 = arith.constant 1 : i32
    %0 = arith.muli %arg0, %c1_i32 : i32
    %1 = arith.addi %0, %arg1 : i32
    %c0_i32 = arith.constant 0 : i32
    %c0_i32_0 = arith.constant 0 : i32
    return %c0_i32, %1 : i32, i32
  }
  func.func @transform_2(%arg0: i32, %arg1: i32) -> (i32, i32) {
    %c1_i32 = arith.constant 1 : i32
    %0 = arith.muli %arg0, %c1_i32 : i32
    %1 = arith.addi %0, %arg1 : i32
    %c0_i32 = arith.constant 0 : i32
    %c0_i32_0 = arith.constant 0 : i32
    return %c0_i32, %1 : i32, i32
  }
  func.func @transform_3(%arg0: i32, %arg1: i32) -> (i32, i32) {
    %c0_i32 = arith.constant 0 : i32
    %c0_i32_0 = arith.constant 0 : i32
    return %arg0, %c0_i32 : i32, i32
  }
}

</mosaic_0001>

<llo_original>
// kernel: tpu_custom_call.1
$region0: #{tpu_custom_call.1}
  #allocation0 [shape = 'u32[]', space=smem, size = 0x4, offset = 0x4, fixed_abs, tag = 'smem constant byte address 0x4 - core index']
  #allocation1 [shape = 'u32[72,128]{1,0:T(1,128)}', space=vmem, size = 0x9000, scoped, tag = 'internal scratch']
  #allocation2 [shape = 'f32[1,1]{1,0:T(1,128)}', space=vmem, size = 0x200, scoped, tag = 'scratch operand']
  %s0 = inlined_call_operand.hbm [shape: f32[12,256], index: 0, kind: input, shape index: {}]
  %s1 = inlined_call_operand.hbm [shape: s32[1,256], index: 1, kind: input, shape index: {}]
  %s2 = inlined_call_operand.hbm [shape: f32[1,256], index: 2, kind: input, shape index: {}]
  %s3 = inlined_call_operand.hbm [shape: f32[16,128], index: 3, kind: output, shape index: {}]
  %s4 = sld [smem:[#allocation0]]
  $region65: #{tpu_custom_call.1} parent=0
    _
  %s6 = ssub.s32 1, %s4
  %s7 = scalar_select 0, %s6, %s4
  $region1: #{tpu_custom_call.1} parent=0
    #allocation3 [shape = 'u8[16384]{0}', space=vmem, size = 0x4000, scoped, tag = 'input window, operand 0']
    #allocation4 [shape = 's32[2]{0}', space=sflag, size = 0x8, scoped, tag = 'scoped memory for tpu_custom_call.1']
    #allocation5 [shape = 's32[2]{0}', space=sflag, size = 0x8, scoped, tag = 'scoped memory for tpu_custom_call.1']
    #allocation6 [shape = 'u8[1024]{0}', space=vmem, size = 0x400, scoped, tag = 'input window, operand 1']
    #allocation7 [shape = 's32[2]{0}', space=sflag, size = 0x8, scoped, tag = 'scoped memory for tpu_custom_call.1']
    #allocation8 [shape = 'u8[1024]{0}', space=vmem, size = 0x400, scoped, tag = 'input window, operand 2']
    #allocation9 [shape = 'u8[8192]{0}', space=vmem, size = 0x2000, scoped, tag = 'output window, operand 0']
    %8 = vsyncpa [#allocation4], 0
    %s9 = scalar_lea.sflag [#allocation4], 1
    %10 = vsyncpa %s9, 0
    %11 = vsyncpa [#allocation7], 0
    %s12 = scalar_lea.sflag [#allocation7], 1
    %13 = vsyncpa %s12, 0
    %14 = vsyncpa [#allocation5], 0
    %s15 = scalar_lea.sflag [#allocation5], 1
    %16 = vsyncpa %s15, 0
    loop: start=0, step=1, limit=4
    $region2: #{tpu_custom_call.1} parent=1 // loop_pre_header
      _
    $region3: #{tpu_custom_call.1} parent=1 // loop_header
      %s18 = sphi 0, %s22
      %p19 = scmp.ge.s32.totalorder %s18, 4
      %s25 = sphi 0, %s37
      %s26 = sphi 0, %s33
      %s27 = sphi 0, %s25
      %s28 = sphi 0, %s26
      %s29 = sphi 0, %s27
      %s30 = sphi 0, %s28
      %s42 = sphi 0, %s44
      %s45 = sphi 0, %s42
      %s46 = sphi 0, %s45
      %s62 = sphi 0, %s46
      %s70 = sphi 0, %s72
      %s73 = sphi 0, %s70
      %s74 = sphi 0, %s73
      %s90 = sphi 0, %s74
      %s98 = sphi 0, %s100
      %s101 = sphi 0, %s98
      %s102 = sphi 0, %s101
      %s118 = sphi 0, %s102
      %s124 = sphi 0, %s126
      %s127 = sphi 0, %s124
      %s128 = sphi 0, %s127
      %s144 = sphi 0, %s128
    $region4: #{tpu_custom_call.1} parent=1 // loop_header_branch
      %21 = sbr.rel (%p19) target = $region8
    $region5: #{tpu_custom_call.1} parent=1 // loop_body
      %s23 = ssub.s32 %s18, 1
      %s24 = ssub.s32 %s18, 2
      %s31 = sadd.s32 1, %s26
      %p32 = scmp.ge.s32.totalorder %s31, 1
      %s33 = scalar_select %p32, 0, %s31
      %s34 = sadd.s32 1, %s25
      %s35 = scalar_select %p32, %s34, %s25
      %p36 = scmp.ge.s32.totalorder %s35, 2
      %s37 = scalar_select %p36, 0, %s35
      %s38 = sadd.s32 %s25, %s26
      %s39 = sadd.s32 %s37, %s33
      %s40 = ssub.s32 %s38, %s39
      %p41 = scmp.eq.s32.totalorder %s40, 0
      %s43 = sadd.s32 %s42, 1
      %s44 = scalar_select %p41, %s42, %s43
      %p47 = pneg %p41
      %p48 = scmp.eq.s32.totalorder %s18, 1
      %p49 = por %p47, %p48
      %p50 = scmp.ne.s32.totalorder %s42, %s45
      %p51 = scmp.eq.s32.totalorder %s18, 0
      %p52 = por %p50, %p51
      %p53 = scmp.ne.s32.totalorder %s42, %s45
      %p54 = scmp.eq.s32.totalorder %s23, 1
      %p55 = por %p53, %p54
      %p56 = scmp.ne.s32.totalorder %s45, %s46
      %p57 = scmp.eq.s32.totalorder %s23, 0
      %p58 = por %p56, %p57
      %p59 = scmp.ne.s32.totalorder %s45, %s46
      %p60 = scmp.eq.s32.totalorder %s24, 1
      %p61 = por %p59, %p60
      %p63 = scmp.ne.s32.totalorder %s46, %s62
      %p64 = scmp.eq.s32.totalorder %s24, 0
      %p65 = por %p63, %p64
      %s66 = sadd.s32 %s25, %s26
      %s67 = sadd.s32 %s37, %s33
      %s68 = ssub.s32 %s66, %s67
      %p69 = scmp.eq.s32.totalorder %s68, 0
      %s71 = sadd.s32 %s70, 1
      %s72 = scalar_select %p69, %s70, %s71
      %p75 = pneg %p69
      %p76 = scmp.eq.s32.totalorder %s18, 1
      %p77 = por %p75, %p76
      %p78 = scmp.ne.s32.totalorder %s70, %s73
      %p79 = scmp.eq.s32.totalorder %s18, 0
      %p80 = por %p78, %p79
      %p81 = scmp.ne.s32.totalorder %s70, %s73
      %p82 = scmp.eq.s32.totalorder %s23, 1
      %p83 = por %p81, %p82
      %p84 = scmp.ne.s32.totalorder %s73, %s74
      %p85 = scmp.eq.s32.totalorder %s23, 0
      %p86 = por %p84, %p85
      %p87 = scmp.ne.s32.totalorder %s73, %s74
      %p88 = scmp.eq.s32.totalorder %s24, 1
      %p89 = por %p87, %p88
      %p91 = scmp.ne.s32.totalorder %s74, %s90
      %p92 = scmp.eq.s32.totalorder %s24, 0
      %p93 = por %p91, %p92
      %s94 = sadd.s32 %s25, %s26
      %s95 = sadd.s32 %s37, %s33
      %s96 = ssub.s32 %s94, %s95
      %p97 = scmp.eq.s32.totalorder %s96, 0
      %s99 = sadd.s32 %s98, 1
      %s100 = scalar_select %p97, %s98, %s99
      %p103 = pneg %p97
      %p104 = scmp.eq.s32.totalorder %s18, 1
      %p105 = por %p103, %p104
      %p106 = scmp.ne.s32.totalorder %s98, %s101
      %p107 = scmp.eq.s32.totalorder %s18, 0
      %p108 = por %p106, %p107
      %p109 = scmp.ne.s32.totalorder %s98, %s101
      %p110 = scmp.eq.s32.totalorder %s23, 1
      %p111 = por %p109, %p110
      %p112 = scmp.ne.s32.totalorder %s101, %s102
      %p113 = scmp.eq.s32.totalorder %s23, 0
      %p114 = por %p112, %p113
      %p115 = scmp.ne.s32.totalorder %s101, %s102
      %p116 = scmp.eq.s32.totalorder %s24, 1
      %p117 = por %p115, %p116
      %p119 = scmp.ne.s32.totalorder %s102, %s118
      %p120 = scmp.eq.s32.totalorder %s24, 0
      %p121 = por %p119, %p120
      %s122 = ssub.s32 %s25, %s37
      %p123 = scmp.eq.s32.totalorder %s122, 0
      %s125 = sadd.s32 %s124, 1
      %s126 = scalar_select %p123, %s124, %s125
      %p129 = pneg %p123
      %p130 = scmp.eq.s32.totalorder %s18, 1
      %p131 = por %p129, %p130
      %p132 = scmp.ne.s32.totalorder %s124, %s127
      %p133 = scmp.eq.s32.totalorder %s18, 0
      %p134 = por %p132, %p133
      %p135 = scmp.ne.s32.totalorder %s124, %s127
      %p136 = scmp.eq.s32.totalorder %s23, 1
      %p137 = por %p135, %p136
      %p138 = scmp.ne.s32.totalorder %s127, %s128
      %p139 = scmp.eq.s32.totalorder %s23, 0
      %p140 = por %p138, %p139
      %p141 = scmp.ne.s32.totalorder %s127, %s128
      %p142 = scmp.eq.s32.totalorder %s24, 1
      %p143 = por %p141, %p142
      %p145 = scmp.ne.s32.totalorder %s128, %s144
      %p146 = scmp.eq.s32.totalorder %s24, 0
      %p147 = por %p145, %p146
      %p148 = scmp.le.s32.totalorder 1, %s18
      %p149 = scmp.lt.s32.totalorder %s18, 3
      %p150 = pnand %p148, %p149
      %p151 = pneg %p150
      // Predicated region
      $region9: #{tpu_custom_call.1} parent=5 // pred_check
        _
      $region10: #{tpu_custom_call.1} parent=5 // pred_check_branch
        %153 = sbr.rel (%p150) target = $region12
      $region11: #{tpu_custom_call.1} parent=5 // pred_region
        %s154 = ssub.s32 %s18, 1
      $region12: #{tpu_custom_call.1} parent=5 // pred_fallthru
        _
      %p155 = scmp.lt.s32.totalorder %s18, 2
      // Predicated region
      $region13: #{tpu_custom_call.1} parent=5 // pred_check
        %p156 = pneg %p155
      $region14: #{tpu_custom_call.1} parent=5 // pred_check_branch
        %158 = sbr.rel (%p156) target = $region16
      $region15: #{tpu_custom_call.1} parent=5 // pred_region
        // Predicated region
        $region17: #{tpu_custom_call.1} parent=15 // pred_check
          %p159 = pneg %p52
        $region18: #{tpu_custom_call.1} parent=15 // pred_check_branch
          %161 = sbr.rel (%p159) target = $region20
        $region19: #{tpu_custom_call.1} parent=15 // pred_region
          %s162 = sand.u32 %s42, 1
          %s163 = scalar_lea.sflag [#allocation4], %s162
          %s164 = sand.u32 %s42, 1
          %s165 = smul.addr %s164, 16
          %s166 = scalar_lea.vmem [#allocation3], %s165
          %s167 = sadd.s32 %s25, %s26
          %169 = vsyncadd %s163, 0
          %s170 = smul.addr %s167, 8
          %s171 = scalar_lea.hbm %s0, %s170
          %s172 = sshll.u32 %s171, 4
          %s173 = int_to_ptr.hbm [resolvable:$true] %s172
          %s174 = sshll.u32 %s166, 4
          %s175 = int_to_ptr.vmem [resolvable:$true] %s174
          %180 = dma.hbm_to_vmem [thread:$0]  %s173, 256, %s175, %s163, 256, 128, 8
        $region20: #{tpu_custom_call.1} parent=15 // pred_fallthru
          _
        // Predicated region
        $region21: #{tpu_custom_call.1} parent=15 // pred_check
          %p181 = pneg %p80
        $region22: #{tpu_custom_call.1} parent=15 // pred_check_branch
          %183 = sbr.rel (%p181) target = $region24
        $region23: #{tpu_custom_call.1} parent=15 // pred_region
          %s184 = sand.u32 %s18, 1
          %s185 = scalar_lea.sflag [#allocation7], %s184
          %s186 = sand.u32 %s70, 1
          %s187 = scalar_lea.vmem [#allocation6], %s186
          %s188 = sadd.s32 %s25, %s26
          %190 = vsyncadd %s185, 0
          %s191 = scalar_lea.hbm %s1, %s188
          %s193 = sshll.u32 %s191, 4
          %s194 = int_to_ptr.hbm [resolvable:$true] %s193
          %s195 = sshll.u32 %s187, 4
          %s196 = int_to_ptr.vmem [resolvable:$true] %s195
          %198 = dma.hbm_to_vmem [thread:$0]  %s194, 16, %s196, %s185
        $region24: #{tpu_custom_call.1} parent=15 // pred_fallthru
          _
        // Predicated region
        $region25: #{tpu_custom_call.1} parent=15 // pred_check
          %p199 = pneg %p108
        $region26: #{tpu_custom_call.1} parent=15 // pred_check_branch
          %201 = sbr.rel (%p199) target = $region28
        $region27: #{tpu_custom_call.1} parent=15 // pred_region
          %s202 = sand.u32 %s18, 1
          %s203 = scalar_lea.sflag [#allocation7], %s202
          %s204 = sand.u32 %s98, 1
          %s205 = scalar_lea.vmem [#allocation8], %s204
          %s206 = sadd.s32 %s25, %s26
          %208 = vsyncadd %s203, 0
          %s209 = scalar_lea.hbm %s2, %s206
          %s211 = sshll.u32 %s209, 4
          %s212 = int_to_ptr.hbm [resolvable:$true] %s211
          %s213 = sshll.u32 %s205, 4
          %s214 = int_to_ptr.vmem [resolvable:$true] %s213
          %216 = dma.hbm_to_vmem [thread:$0]  %s212, 16, %s214, %s203
        $region28: #{tpu_custom_call.1} parent=15 // pred_fallthru
          _
      $region16: #{tpu_custom_call.1} parent=5 // pred_fallthru
        _
      %p217 = scmp.le.s32.totalorder 1, %s18
      %p218 = scmp.lt.s32.totalorder %s18, 3
      %p219 = pnand %p217, %p218
      %p220 = pneg %p219
      // Predicated region
      $region29: #{tpu_custom_call.1} parent=5 // pred_check
        _
      $region30: #{tpu_custom_call.1} parent=5 // pred_check_branch
        %222 = sbr.rel (%p219) target = $region32
      $region31: #{tpu_custom_call.1} parent=5 // pred_region
        %s223 = ssub.s32 %s18, 1
        %s224 = sand.u32 %s45, 1
        %s225 = scalar_lea.sflag [#allocation4], %s224
        %s226 = sand.u32 %s45, 1
        %s227 = smul.addr %s226, 16
        %s228 = scalar_lea.vmem [#allocation3], %s227
        // Predicated region
        $region33: #{tpu_custom_call.1} parent=31 // pred_check
          %p229 = pneg %p58
        $region34: #{tpu_custom_call.1} parent=31 // pred_check_branch
          %231 = sbr.rel (%p229) target = $region36
        $region35: #{tpu_custom_call.1} parent=31 // pred_region
          %233 = dma.done %s225, 256
        $region36: #{tpu_custom_call.1} parent=31 // pred_fallthru
          _
        %s234 = sand.u32 %s23, 1
        %s235 = scalar_lea.sflag [#allocation7], %s234
        %s236 = sand.u32 %s73, 1
        %s237 = scalar_lea.vmem [#allocation6], %s236
        // Predicated region
        $region37: #{tpu_custom_call.1} parent=31 // pred_check
          %p238 = pneg %p86
        $region38: #{tpu_custom_call.1} parent=31 // pred_check_branch
          %240 = sbr.rel (%p238) target = $region40
        $region39: #{tpu_custom_call.1} parent=31 // pred_region
          %242 = dma.done %s235, 16
        $region40: #{tpu_custom_call.1} parent=31 // pred_fallthru
          _
        %s243 = sand.u32 %s23, 1
        %s244 = scalar_lea.sflag [#allocation7], %s243
        %s245 = sand.u32 %s101, 1
        %s246 = scalar_lea.vmem [#allocation8], %s245
        // Predicated region
        $region41: #{tpu_custom_call.1} parent=31 // pred_check
          %p247 = pneg %p114
        $region42: #{tpu_custom_call.1} parent=31 // pred_check_branch
          %249 = sbr.rel (%p247) target = $region44
        $region43: #{tpu_custom_call.1} parent=31 // pred_region
          %251 = dma.done %s244, 16
        $region44: #{tpu_custom_call.1} parent=31 // pred_fallthru
          _
        %s252 = sand.u32 %s45, 1
        %s253 = scalar_lea.sflag [#allocation4], %s252
        %s254 = sand.u32 %s45, 1
        %s255 = smul.addr %s254, 16
        %s256 = scalar_lea.vmem [#allocation3], %s255
        %p257 = pneg %p58
        %p258 = pneg %p55
        %s259 = sand.u32 %s23, 1
        %s260 = scalar_lea.sflag [#allocation7], %s259
        %s261 = sand.u32 %s73, 1
        %s262 = scalar_lea.vmem [#allocation6], %s261
        %p263 = pneg %p86
        %p264 = pneg %p83
        %s265 = sand.u32 %s23, 1
        %s266 = scalar_lea.sflag [#allocation7], %s265
        %s267 = sand.u32 %s101, 1
        %s268 = scalar_lea.vmem [#allocation8], %s267
        %p269 = pneg %p114
        %p270 = pneg %p111
        %p271 = pneg %p140
        %p272 = pneg %p137
        %s273 = sand.u32 %s127, 1
        %s274 = scalar_lea.sflag [#allocation5], %s273
        %s275 = sand.u32 %s127, 1
        %s276 = smul.addr %s275, 8
        %s277 = scalar_lea.vmem [#allocation9], %s276
        %s278 = sadd.s32 %s27, %s28
        %s279 = sadd.s32 %s27, %s28
        %s280 = sadd.s32 %s27, %s28
        %p281 = scmp.eq.s32.totalorder %s28, 0
        // Predicated region
        $region45: #{tpu_custom_call.1} parent=31 // pred_check
          %p282 = pneg %p281
        $region46: #{tpu_custom_call.1} parent=31 // pred_check_branch
          %284 = sbr.rel (%p282) target = $region48
        $region47: #{tpu_custom_call.1} parent=31 // pred_region
          %vm285 = vcmask 0
          %286 = vst.msk [vmem:[#allocation2] sm:$0x1] %vm285, 0.0
        $region48: #{tpu_custom_call.1} parent=31 // pred_fallthru
          _
        %v287 = vld [vmem:[%s228] sm:$0xff]
        %v288 = vld [vmem:[%s228 + $0x8] sm:$0xf]
        %v289 = vld [vmem:[%s237] sm:$0x1]
        %v290 = vld [vmem:[%s246] sm:$0x1]
        %vm291 = vcmask 1043456
        %v292 = vsel %vm291, %v288, -inf
        %v293 = vmax.f32 %v287, %v292
        %v294 = vrot.slane %v293, 4
        %v295 = vmax.f32 %v293, %v294
        %v296 = vrot.slane %v295, 2
        %v297 = vmax.f32 %v295, %v296
        %v298 = vrot.slane %v297, 1
        %v299 = vmax.f32 %v297, %v298
        %v300 = vsub.f32 %v287, %v299
        %v301 = vsub.f32 %v288, %v299
        %v302 = vmul.f32 %v300, 1.442695
        %v303 = vpow.pop %v302
        %v304 = vmul.f32 %v301, 1.442695
        %v305 = vpow.pop %v304
        %v306 = vsel %vm291, %v305, 0.0
        %v307 = vadd.f32 %v303, %v306
        %v308 = vrot.slane %v307, 4
        %v309 = vadd.f32 %v307, %v308
        %v310 = vrot.slane %v309, 2
        %v311 = vadd.f32 %v309, %v310
        %v312 = vrot.slane %v311, 1
        %v313 = vadd.f32 %v311, %v312
        %v314 = vlaneseq
        %v315 = vshrl.u32 %v314, 7
        %v316 = vadd.s32 %v315, 8
        %v317 = vperm.slane %v289, 0
        %vm318 = vcmp.eq.s32.totalorder %v315, %v317
        %vm319 = vcmp.eq.s32.totalorder %v316, %v317
        %v320 = vsel %vm318, %v300, 0.0
        %v321 = vsel %vm319, %v301, 0.0
        %v322 = vsel %vm291, %v321, 0.0
        %v323 = vadd.f32 %v320, %v322
        %v324 = vrot.slane %v323, 4
        %v325 = vadd.f32 %v323, %v324
        %v326 = vrot.slane %v325, 2
        %v327 = vadd.f32 %v325, %v326
        %v328 = vrot.slane %v327, 1
        %v329 = vadd.f32 %v327, %v328
        %v330 = vlog2.pop %v313
        %v331 = vmul.f32 %v330, 0.6931472
        %v332 = vsub.f32 %v329, %v331
        %v333 = vmul.f32 %v332, 0.2
        %v334 = vmul.f32 %v333, 1.442695
        %v335 = vpow.pop %v334
        %v336 = vld [vmem:[#allocation2] sm:$0x1]
        %v337 = vsub.f32 1.0, %v335
        %v338 = vmul.f32 %v337, %v290
        %vm339 = vcmask 1040384
        %v340 = vsel %vm339, %v338, 0.0
        %341 = vadd.xlane.f32.xlu0 %v340
        %v342 = vpop.xlane.xlu0 %341
        %v343 = vadd.f32 %v336, %v342
        %vm344 = vcmask 0
        %345 = vst.msk [vmem:[#allocation2] sm:$0x1] %vm344, %v343
        // Predicated region
        $region49: #{tpu_custom_call.1} parent=31 // pred_check
          %p346 = pneg %p281
        $region50: #{tpu_custom_call.1} parent=31 // pred_check_branch
          %348 = sbr.rel (%p346) target = $region52
        $region51: #{tpu_custom_call.1} parent=31 // pred_region
          %v349 = vld [vmem:[#allocation2] sm:$0x1]
          %v350 = vmul.f32 %v349, 0.3125
          %v352 = vperm.slane %v350, 0
          %353 = vset.pattern.permute.xlu0 0
          %354 = vperm.xlu0 %353, %v352
          %v355 = vpop.permute.xlu0 %354
          %357 = vst [vmem:[%s277] sm:$0xff] %v355
        $region52: #{tpu_custom_call.1} parent=31 // pred_fallthru
          _
        %s358 = sand.u32 %s127, 1
        %s359 = scalar_lea.sflag [#allocation5], %s358
        %s360 = sand.u32 %s127, 1
        %s361 = smul.addr %s360, 8
        %s362 = scalar_lea.vmem [#allocation9], %s361
        // Predicated region
        $region53: #{tpu_custom_call.1} parent=31 // pred_check
          %p363 = pneg %p137
        $region54: #{tpu_custom_call.1} parent=31 // pred_check_branch
          %365 = sbr.rel (%p363) target = $region56
        $region55: #{tpu_custom_call.1} parent=31 // pred_region
          %367 = vsyncadd %s359, 0
          %s368 = smul.addr %s27, 8
          %s369 = scalar_lea.hbm %s3, %s368
          %s371 = sshll.u32 %s362, 4
          %s372 = int_to_ptr.vmem [resolvable:$true] %s371
          %s373 = sshll.u32 %s369, 4
          %s374 = int_to_ptr.hbm [resolvable:$true] %s373
          %376 = dma.vmem_to_hbm [thread:$0]  %s372, 128, %s374, %s359
        $region56: #{tpu_custom_call.1} parent=31 // pred_fallthru
          _
      $region32: #{tpu_custom_call.1} parent=5 // pred_fallthru
        _
      %p377 = scmp.le.s32.totalorder 2, %s18
      // Predicated region
      $region57: #{tpu_custom_call.1} parent=5 // pred_check
        %p378 = pneg %p377
      $region58: #{tpu_custom_call.1} parent=5 // pred_check_branch
        %380 = sbr.rel (%p378) target = $region60
      $region59: #{tpu_custom_call.1} parent=5 // pred_region
        %s381 = ssub.s32 %s18, 2
        // Predicated region
        $region61: #{tpu_custom_call.1} parent=59 // pred_check
          %p382 = pneg %p143
        $region62: #{tpu_custom_call.1} parent=59 // pred_check_branch
          %384 = sbr.rel (%p382) target = $region64
        $region63: #{tpu_custom_call.1} parent=59 // pred_region
          %s385 = sand.u32 %s128, 1
          %s386 = scalar_lea.sflag [#allocation5], %s385
          %s387 = sand.u32 %s128, 1
          %s388 = smul.addr %s387, 8
          %s389 = scalar_lea.vmem [#allocation9], %s388
          %391 = dma.done %s386, 128
        $region64: #{tpu_custom_call.1} parent=59 // pred_fallthru
          _
      $region60: #{tpu_custom_call.1} parent=5 // pred_fallthru
        _
    $region6: #{tpu_custom_call.1} parent=1 // loop_footer
      %s22 = sadd.s32 1, %s18
    $region7: #{tpu_custom_call.1} parent=1 // loop_footer_branch
      %17 = sbr.rel target = $region3
    $region8: #{tpu_custom_call.1} parent=1 // loop_exit
      _
    %392 = vsyncpa [#allocation4], 1
    %s393 = scalar_lea.sflag [#allocation4], 1
    %394 = vsyncpa %s393, 1
    %395 = vsyncpa [#allocation7], 1
    %s396 = scalar_lea.sflag [#allocation7], 1
    %397 = vsyncpa %s396, 1
    %398 = vsyncpa [#allocation5], 1
    %s399 = scalar_lea.sflag [#allocation5], 1
    %400 = vsyncpa %s399, 1

</llo_original>
